<compile_context>
chip_gen: v7x
topology: tpu7x:2x2x1
jax: 0.10.0
libtpu: 0.0.40
codegen_flags: <defaults>
</compile_context>

<pallas_src>
import jax
import jax.numpy as jnp
from jax.experimental import pallas as pl
from jax.experimental.pallas import tpu as pltpu


def _round_up(x, m):
    return (x + m - 1) // m * m


def _default_fc1_on_mxu():
    # fc1-on-MXU pays off on v6e/v7x (kernel is VALU-bound at f32 there); on
    # v5e the smaller MXU is closer to binding, so keep fc1 on the VPU.
    try:
        kind = jax.devices()[0].device_kind.lower()
    except Exception:
        return True
    return "v5" not in kind


def _make_pointnet_kernel(n_chunks, chunk, fc1_on_mxu):
    def kernel(x_ref, w1_ref, w2_ref, b2_ref, w3_ref, b3_ref, o_ref):
        # x_ref: (8, TM) tile; rows 0..2 = xyz, row 3 = 1.0 (bias lane), 4..7 = 0.
        # Static loop over 256-point chunks: static aligned slices, and h1/h2
        # live in vregs per chunk instead of being materialized in VMEM.
        for c in range(n_chunks):
            sl = slice(c * chunk, (c + 1) * chunk)
            x8 = x_ref[:, sl]                                    # (8, chunk) f32

            # fc1 (b1 folded into column 3 of the augmented W1 via the ones row).
            if fc1_on_mxu:
                h1 = jnp.dot(w1_ref[...], x8,
                             preferred_element_type=jnp.float32)
            else:
                h1 = (w1_ref[:, 0:1] * x8[0:1, :]
                      + w1_ref[:, 1:2] * x8[1:2, :]
                      + w1_ref[:, 2:3] * x8[2:3, :]
                      + w1_ref[:, 3:4])                          # b1 column
            h1 = jnp.maximum(h1, 0.0).astype(jnp.bfloat16)       # (64, chunk)

            # fc2: (128, 64) bf16 @ (64, chunk) bf16, f32 accumulate on MXU.
            h2 = jnp.dot(w2_ref[...], h1,
                         preferred_element_type=jnp.float32)
            h2 = jnp.maximum(h2 + b2_ref[...], 0.0).astype(jnp.bfloat16)

            # fc3: (3, 128) bf16 @ (128, chunk) bf16 -> (3, chunk), lane-dense.
            h3 = jnp.dot(w3_ref[...], h2,
                         preferred_element_type=jnp.float32)
            o_ref[:, sl] = (h3 + b3_ref[...]).astype(o_ref.dtype)

    return kernel


def pointnet_forward(x, params, *, tile_m=8192, chunk=256, fc1_on_mxu=None):
    """x: (B, N, 3) float32 -> (B, N, 3) float32."""
    w1, b1, w2, b2, w3, b3 = params
    B, N, C = x.shape
    assert C == 3
    M = B * N
    if fc1_on_mxu is None:
        fc1_on_mxu = _default_fc1_on_mxu()

    # Chunk: multiple of 256 (MXU streaming width on v6e/v7x, 2 lane tiles).
    chunk = max(256, _round_up(chunk, 256))
    # Tile: big (amortize per-step overhead), multiple of chunk, but capped so
    # the grid keeps >= 2 steps when there is enough work (v7x: 2 TCs).
    tile_m = _round_up(tile_m, chunk)
    half_m = _round_up(-(-M // 2), chunk)
    tile_m_eff = max(chunk, min(tile_m, half_m))
    M_pad = _round_up(M, tile_m_eff)
    n_chunks = tile_m_eff // chunk

    # Lane-dense input: (8, M_pad).  Rows 0..2 = xyz, row 3 = 1.0 so b1 folds
    # into the augmented W1, rows 4..7 = 0 (K padding for the MXU path).
    # TODO(synk): could try CompilerParams(allow_input_fusion) to fold this
    # pad/concat/transpose into the pallas_call input instead of separate XLA ops.
    x2 = x.reshape(M, C).astype(jnp.float32)
    x8 = jnp.concatenate(
        [x2, jnp.ones((M, 1), jnp.float32), jnp.zeros((M, 4), jnp.float32)],
        axis=1)
    if M_pad != M:
        x8 = jnp.pad(x8, ((0, M_pad - M), (0, 0)))
    xT = x8.T                                                    # (8, M_pad)

    # W1 augmented with b1 (+ zero K-padding); W2/W3 pre-cast to bf16 once
    # here so the cast is not re-executed every grid step.
    w1_aug = jnp.concatenate(
        [w1, b1, jnp.zeros((w1.shape[0], 4), jnp.float32)], axis=1)   # (64, 8)
    w2_bf = w2.astype(jnp.bfloat16)                                   # (128, 64)
    w3_bf = w3.astype(jnp.bfloat16)                                   # (3, 128)

    grid = (M_pad // tile_m_eff,)

    def full_spec(shape):
        return pl.BlockSpec(shape, lambda i: (0,) * len(shape))

    outT = pl.pallas_call(
        _make_pointnet_kernel(n_chunks, chunk, fc1_on_mxu),
        out_shape=jax.ShapeDtypeStruct((3, M_pad), jnp.float32),
        grid_spec=pltpu.PrefetchScalarGridSpec(
            num_scalar_prefetch=0,
            grid=grid,
            in_specs=[
                pl.BlockSpec((8, tile_m_eff), lambda i: (0, i)),   # x tile
                full_spec(w1_aug.shape),
                full_spec(w2_bf.shape), full_spec(b2.shape),
                full_spec(w3_bf.shape), full_spec(b3.shape),
            ],
            out_specs=pl.BlockSpec((3, tile_m_eff), lambda i: (0, i)),
        ),
        compiler_params=pltpu.CompilerParams(
            dimension_semantics=("parallel",)),
    )(xT, w1_aug, w2_bf, b2, w3_bf, b3)

    out = outT.T[:M]                             # drop padding, back to (M, 3)
    return out.reshape(B, N, 3)


def init_params(key):
    """Deterministic init matching nn.Linear (weights stored (out, in))."""
    def linear(key, fan_in, fan_out):
        kw, kb = jax.random.split(key)
        bound = 1.0 / jnp.sqrt(fan_in)
        w = jax.random.uniform(kw, (fan_out, fan_in), jnp.float32,
                               -bound, bound)
        b = jax.random.uniform(kb, (fan_out, 1), jnp.float32, -bound, bound)
        return w, b

    k1, k2, k3 = jax.random.split(key, 3)
    w1, b1 = linear(k1, 3, 64)     # fc1: Linear(3, 64)
    w2, b2 = linear(k2, 64, 128)   # fc2: Linear(64, 128)
    w3, b3 = linear(k3, 128, 3)    # fc3: Linear(128, 3)
    return (w1, b1, w2, b2, w3, b3)


def pointnet_reference(x, params):
    w1, b1, w2, b2, w3, b3 = params
    h = jnp.maximum(x @ w1.T + b1[:, 0], 0.0)
    h = jnp.maximum(h @ w2.T + b2[:, 0], 0.0)
    return h @ w3.T + b3[:, 0]


if __name__ == "__main__":
    key = jax.random.PRNGKey(0)
    kx, kp = jax.random.split(key)

    B, N = 2, 8                      # 2 point clouds, 8 points each
    x = jax.random.normal(kx, (B, N, 3), dtype=jnp.float32)
    params = init_params(kp)

    y = jax.jit(pointnet_forward)(x, params)
    y = jax.block_until_ready(y)

    y_ref = pointnet_reference(x, params)
    assert y.shape == (B, N, 3)
    # bf16 MXU operands for fc2/fc3 -> loosen tolerance vs the f32 reference.
    assert jnp.allclose(y, y_ref, atol=2e-2, rtol=2e-2)

    print("KERNEL_OK")
</pallas_src>

<mosaic_0001>
module attributes {stable_mosaic.version = 11 : i64} {
  func.func @kernel(%arg0: i32, %arg1: memref<8x256xf32, #tpu.memory_space<vmem>>, %arg2: memref<64x8xf32, #tpu.memory_space<vmem>>, %arg3: memref<128x64xbf16, #tpu.memory_space<vmem>>, %arg4: memref<128x1xf32, #tpu.memory_space<vmem>>, %arg5: memref<3x128xbf16, #tpu.memory_space<vmem>>, %arg6: memref<3x1xf32, #tpu.memory_space<vmem>>, %arg7: memref<3x256xf32, #tpu.memory_space<vmem>>) attributes {dimension_semantics = [#tpu.dimension_semantics<parallel>], iteration_bounds = array<i64: 1>, scalar_prefetch = 0 : i64, scratch_operands = 0 : i64, tpu.core_type = #tpu.core_type<tc>, window_params = [{transform_indices = @transform_0, window_bounds = array<i64: 8, 256>}, {pipeline_mode = #tpu.pipeline_mode<synchronous>, transform_indices = @transform_1, window_bounds = array<i64: 64, 8>}, {pipeline_mode = #tpu.pipeline_mode<synchronous>, transform_indices = @transform_2, window_bounds = array<i64: 128, 64>}, {pipeline_mode = #tpu.pipeline_mode<synchronous>, transform_indices = @transform_3, window_bounds = array<i64: 128, 1>}, {pipeline_mode = #tpu.pipeline_mode<synchronous>, transform_indices = @transform_4, window_bounds = array<i64: 3, 128>}, {pipeline_mode = #tpu.pipeline_mode<synchronous>, transform_indices = @transform_5, window_bounds = array<i64: 3, 1>}, {transform_indices = @transform_6, window_bounds = array<i64: 3, 256>}]} {
    %c0 = arith.constant 0 : index
    %c0_0 = arith.constant 0 : index
    %0 = vector.load %arg1[%c0, %c0_0] : memref<8x256xf32, #tpu.memory_space<vmem>>, vector<8x256xf32>
    %c0_1 = arith.constant 0 : index
    %c0_2 = arith.constant 0 : index
    %1 = vector.load %arg2[%c0_1, %c0_2] : memref<64x8xf32, #tpu.memory_space<vmem>>, vector<64x8xf32>
    %cst = arith.constant dense<0.000000e+00> : vector<64x256xf32>
    %2 = tpu.matmul %1, %0, %cst {dimension_numbers = #tpu.dot_dimension_numbers<[1], [0], [0], [1], [0, 0, 1, 1], [], []>} : vector<64x8xf32>, vector<8x256xf32>, vector<64x256xf32> -> vector<64x256xf32>
    %cst_3 = arith.constant 0.000000e+00 : f32
    %3 = vector.broadcast %cst_3 : f32 to vector<64x256xf32>
    %4 = arith.maximumf %2, %3 : vector<64x256xf32>
    %5 = arith.truncf %4 : vector<64x256xf32> to vector<64x256xbf16>
    %c0_4 = arith.constant 0 : index
    %c0_5 = arith.constant 0 : index
    %6 = vector.load %arg3[%c0_4, %c0_5] : memref<128x64xbf16, #tpu.memory_space<vmem>>, vector<128x64xbf16>
    %cst_6 = arith.constant dense<0.000000e+00> : vector<128x256xf32>
    %7 = tpu.matmul %6, %5, %cst_6 {dimension_numbers = #tpu.dot_dimension_numbers<[1], [0], [0], [1], [0, 0, 1, 1], [], []>} : vector<128x64xbf16>, vector<64x256xbf16>, vector<128x256xf32> -> vector<128x256xf32>
    %c0_7 = arith.constant 0 : index
    %c0_8 = arith.constant 0 : index
    %8 = vector.load %arg4[%c0_7, %c0_8] : memref<128x1xf32, #tpu.memory_space<vmem>>, vector<128x1xf32>
    %9 = vector.broadcast %8 : vector<128x1xf32> to vector<128x256xf32>
    %10 = arith.addf %7, %9 : vector<128x256xf32>
    %cst_9 = arith.constant 0.000000e+00 : f32
    %11 = vector.broadcast %cst_9 : f32 to vector<128x256xf32>
    %12 = arith.maximumf %10, %11 : vector<128x256xf32>
    %13 = arith.truncf %12 : vector<128x256xf32> to vector<128x256xbf16>
    %c0_10 = arith.constant 0 : index
    %c0_11 = arith.constant 0 : index
    %14 = vector.load %arg5[%c0_10, %c0_11] : memref<3x128xbf16, #tpu.memory_space<vmem>>, vector<3x128xbf16>
    %cst_12 = arith.constant dense<0.000000e+00> : vector<3x256xf32>
    %15 = tpu.matmul %14, %13, %cst_12 {dimension_numbers = #tpu.dot_dimension_numbers<[1], [0], [0], [1], [0, 0, 1, 1], [], []>} : vector<3x128xbf16>, vector<128x256xbf16>, vector<3x256xf32> -> vector<3x256xf32>
    %c0_13 = arith.constant 0 : index
    %c0_14 = arith.constant 0 : index
    %16 = vector.load %arg6[%c0_13, %c0_14] : memref<3x1xf32, #tpu.memory_space<vmem>>, vector<3x1xf32>
    %17 = vector.broadcast %16 : vector<3x1xf32> to vector<3x256xf32>
    %18 = arith.addf %15, %17 : vector<3x256xf32>
    %c0_15 = arith.constant 0 : index
    %c0_16 = arith.constant 0 : index
    %19 = vector.load %arg7[%c0_15, %c0_16] : memref<3x256xf32, #tpu.memory_space<vmem>>, vector<3x256xf32>
    tpu.vector_store %arg7[%c0_15, %c0_16], %18 {strides = array<i32>} : memref<3x256xf32, #tpu.memory_space<vmem>>, vector<3x256xf32>,
    return
  }
  func.func @transform_0(%arg0: i32) -> (i32, i32) {
    %c0_i32 = arith.constant 0 : i32
    %c0_i32_0 = arith.constant 0 : i32
    return %c0_i32, %arg0 : i32, i32
  }
  func.func @transform_1(%arg0: i32) -> (i32, i32) {
    %c0_i32 = arith.constant 0 : i32
    %c0_i32_0 = arith.constant 0 : i32
    %c0_i32_1 = arith.constant 0 : i32
    return %c0_i32, %c0_i32_0 : i32, i32
  }
  func.func @transform_2(%arg0: i32) -> (i32, i32) {
    %c0_i32 = arith.constant 0 : i32
    %c0_i32_0 = arith.constant 0 : i32
    %c0_i32_1 = arith.constant 0 : i32
    return %c0_i32, %c0_i32_0 : i32, i32
  }
  func.func @transform_3(%arg0: i32) -> (i32, i32) {
    %c0_i32 = arith.constant 0 : i32
    %c0_i32_0 = arith.constant 0 : i32
    %c0_i32_1 = arith.constant 0 : i32
    return %c0_i32, %c0_i32_0 : i32, i32
  }
  func.func @transform_4(%arg0: i32) -> (i32, i32) {
    %c0_i32 = arith.constant 0 : i32
    %c0_i32_0 = arith.constant 0 : i32
    %c0_i32_1 = arith.constant 0 : i32
    return %c0_i32, %c0_i32_0 : i32, i32
  }
  func.func @transform_5(%arg0: i32) -> (i32, i32) {
    %c0_i32 = arith.constant 0 : i32
    %c0_i32_0 = arith.constant 0 : i32
    %c0_i32_1 = arith.constant 0 : i32
    return %c0_i32, %c0_i32_0 : i32, i32
  }
  func.func @transform_6(%arg0: i32) -> (i32, i32) {
    %c0_i32 = arith.constant 0 : i32
    %c0_i32_0 = arith.constant 0 : i32
    return %c0_i32, %arg0 : i32, i32
  }
}

</mosaic_0001>

<llo_original>
// kernel: pointnet_forward.1
$region0: #{pointnet_forward.1}
  #allocation0 [shape = 'u32[]', space=smem, size = 0x4, offset = 0x4, fixed_abs, tag = 'smem constant byte address 0x4 - core index']
  #allocation1 [shape = 'u32[144,128]{1,0:T(1,128)}', space=vmem, size = 0x12000, scoped, tag = 'internal scratch']
  %s0 = inlined_call_operand.vmem [shape: f32[8,256], index: 0, kind: input, shape index: {}]
  %s1 = inlined_call_operand.vmem [shape: f32[64,8], index: 1, kind: input, shape index: {}]
  %s2 = inlined_call_operand.vmem [shape: bf16[128,64], index: 2, kind: input, shape index: {}]
  %s3 = inlined_call_operand.vmem [shape: f32[128,1], index: 3, kind: input, shape index: {}]
  %s4 = inlined_call_operand.vmem [shape: bf16[3,128], index: 4, kind: input, shape index: {}]
  %s5 = inlined_call_operand.vmem [shape: f32[3,1], index: 5, kind: input, shape index: {}]
  %s6 = inlined_call_operand.vmem [shape: f32[3,256], index: 6, kind: output, shape index: {}]
  %s7 = sld [smem:[#allocation0]]
  $region34: #{pointnet_forward.1} parent=0
    _
  %s9 = ssub.s32 1, %s7
  %s10 = scalar_select 0, %s9, %s7
  // Predicated region
  $region2: #{pointnet_forward.1} parent=0 // pred_check
    _
  $region3: #{pointnet_forward.1} parent=0 // pred_check_branch
    %12 = sbr.rel (0) target = $region5
  $region4: #{pointnet_forward.1} parent=0 // pred_region
    _
  $region5: #{pointnet_forward.1} parent=0 // pred_fallthru
    _
  // Predicated region
  $region6: #{pointnet_forward.1} parent=0 // pred_check
    _
  $region7: #{pointnet_forward.1} parent=0 // pred_check_branch
    %14 = sbr.rel (0) target = $region9
  $region8: #{pointnet_forward.1} parent=0 // pred_region
    _
  $region9: #{pointnet_forward.1} parent=0 // pred_fallthru
    _
  // Predicated region
  $region10: #{pointnet_forward.1} parent=0 // pred_check
    _
  $region11: #{pointnet_forward.1} parent=0 // pred_check_branch
    %16 = sbr.rel (0) target = $region13
  $region12: #{pointnet_forward.1} parent=0 // pred_region
    _
  $region13: #{pointnet_forward.1} parent=0 // pred_fallthru
    _
  // Predicated region
  $region14: #{pointnet_forward.1} parent=0 // pred_check
    _
  $region15: #{pointnet_forward.1} parent=0 // pred_check_branch
    %18 = sbr.rel (0) target = $region17
  $region16: #{pointnet_forward.1} parent=0 // pred_region
    _
  $region17: #{pointnet_forward.1} parent=0 // pred_fallthru
    _
  // Predicated region
  $region18: #{pointnet_forward.1} parent=0 // pred_check
    _
  $region19: #{pointnet_forward.1} parent=0 // pred_check_branch
    %20 = sbr.rel (0) target = $region21
  $region20: #{pointnet_forward.1} parent=0 // pred_region
    _
  $region21: #{pointnet_forward.1} parent=0 // pred_fallthru
    _
  // Predicated region
  $region22: #{pointnet_forward.1} parent=0 // pred_check
    _
  $region23: #{pointnet_forward.1} parent=0 // pred_check_branch
    %22 = sbr.rel (0) target = $region25
  $region24: #{pointnet_forward.1} parent=0 // pred_region
    _
  $region25: #{pointnet_forward.1} parent=0 // pred_fallthru
    _
  %v24 = vld [vmem:[%s0] sm:$0xff]
  %v25 = vld [vmem:[%s0 + $0x8] sm:$0xff]
  %v26 = vld [vmem:[%s1] sm:$0xff]
  %v27 = vld [vmem:[%s1 + $0x8] sm:$0xff]
  %v28 = vld [vmem:[%s1 + $0x10] sm:$0xff]
  %v29 = vld [vmem:[%s1 + $0x18] sm:$0xff]
  %v30 = vld [vmem:[%s1 + $0x20] sm:$0xff]
  %v31 = vld [vmem:[%s1 + $0x28] sm:$0xff]
  %v32 = vld [vmem:[%s1 + $0x30] sm:$0xff]
  %v33 = vld [vmem:[%s1 + $0x38] sm:$0xff]
  %vm34 = vcmask 64512
  %v36 = vsel %vm34, %v26, 0
  %v39 = vsel %vm34, %v27, 0
  %v42 = vsel %vm34, %v28, 0
  %v45 = vsel %vm34, %v29, 0
  %v48 = vsel %vm34, %v30, 0
  %v51 = vsel %vm34, %v31, 0
  %v54 = vsel %vm34, %v32, 0
  %v57 = vsel %vm34, %v33, 0
  %59 = vmatprep.subr.mxu0 %v25
  %60 = vmatpush1.msra.mxu0 %v24
  %61 = vmatprep.subr.mxu0 0.0
  %62 = vmatpush1.msra.mxu0 0.0
  %63 = vmatprep.subr.mxu0 0.0
  %64 = vmatpush1.msra.mxu0 0.0
  %65 = vmatprep.subr.mxu0 0.0
  %66 = vmatpush1.msra.mxu0 0.0
  %67 = vmatprep.subr.mxu0 0.0
  %68 = vmatpush1.msra.mxu0 0.0
  %69 = vmatprep.subr.mxu0 0.0
  %70 = vmatpush1.msra.mxu0 0.0
  %71 = vmatprep.subr.mxu0 0.0
  %72 = vmatpush1.msra.mxu0 0.0
  %73 = vmatprep.subr.mxu0 0.0
  %74 = vmatpush1.msra.mxu0 0.0
  %75 = vmatprep.subr.mxu0 0.0
  %76 = vmatpush1.msra.mxu0 0.0
  %77 = vmatprep.subr.mxu0 0.0
  %78 = vmatpush1.msra.mxu0 0.0
  %79 = vmatprep.subr.mxu0 0.0
  %80 = vmatpush1.msra.mxu0 0.0
  %81 = vmatprep.subr.mxu0 0.0
  %82 = vmatpush1.msra.mxu0 0.0
  %83 = vmatprep.subr.mxu0 0.0
  %84 = vmatpush1.msra.mxu0 0.0
  %85 = vmatprep.subr.mxu0 0.0
  %86 = vmatpush1.msra.mxu0 0.0
  %87 = vmatprep.subr.mxu0 0.0
  %88 = vmatpush1.msra.mxu0 0.0
  %89 = vmatprep.subr.mxu0 0.0
  %90 = vmatpush1.msra.mxu0 0.0
  %91 = vmatprep.subr.mxu0 0.0
  %92 = vmatpush1.msra.mxu0 0.0
  %93 = vmatprep.subr.mxu0 0.0
  %94 = vmatpush1.msra.mxu0 0.0
  %95 = vmatprep.subr.mxu0 0.0
  %96 = vmatpush1.msra.mxu0 0.0
  %97 = vmatprep.subr.mxu0 0.0
  %98 = vmatpush1.msra.mxu0 0.0
  %99 = vmatprep.subr.mxu0 0.0
  %100 = vmatpush1.msra.mxu0 0.0
  %101 = vmatprep.subr.mxu0 0.0
  %102 = vmatpush1.msra.mxu0 0.0
  %103 = vmatprep.subr.mxu0 0.0
  %104 = vmatpush1.msra.mxu0 0.0
  %105 = vmatprep.subr.mxu0 0.0
  %106 = vmatpush1.msra.mxu0 0.0
  %107 = vmatprep.subr.mxu0 0.0
  %108 = vmatpush1.msra.mxu0 0.0
  %109 = vmatprep.subr.mxu0 0.0
  %110 = vmatpush1.msra.mxu0 0.0
  %111 = vmatprep.subr.mxu0 0.0
  %112 = vmatpush1.msra.mxu0 0.0
  %113 = vmatprep.subr.mxu0 0.0
  %114 = vmatpush1.msra.mxu0 0.0
  %115 = vmatprep.subr.mxu0 0.0
  %116 = vmatpush1.msra.mxu0 0.0
  %117 = vmatprep.subr.mxu0 0.0
  %118 = vmatpush1.msra.mxu0 0.0
  %119 = vmatprep.subr.mxu0 0.0
  %120 = vmatpush1.msra.mxu0 0.0
  %121 = vmatprep.subr.mxu0 0.0
  %122 = vmatpush1.msra.mxu0 0.0
  %123 = vmatprep.mubr.f32.mxu0 0.0
  %124 = vmatmul.mubr.f32.gmra.mrb[0].mxu0 %v36
  %v125 = vpop.f32.mrb[0].mxu0
  %v126 = vadd.f32 0.0, %v125
  %v127 = vpop.f32.mrb[0].mxu0
  %v128 = vadd.f32 0.0, %v127
  %129 = vmatprep.mubr.f32.mxu0 0.0
  %130 = vmatmul.mubr.f32.gmra.mrb[0].mxu0 %v39
  %v131 = vpop.f32.mrb[0].mxu0
  %v132 = vadd.f32 0.0, %v131
  %v133 = vpop.f32.mrb[0].mxu0
  %v134 = vadd.f32 0.0, %v133
  %135 = vmatprep.mubr.f32.mxu0 0.0
  %136 = vmatmul.mubr.f32.gmra.mrb[0].mxu0 %v42
  %v137 = vpop.f32.mrb[0].mxu0
  %v138 = vadd.f32 0.0, %v137
  %v139 = vpop.f32.mrb[0].mxu0
  %v140 = vadd.f32 0.0, %v139
  %141 = vmatprep.mubr.f32.mxu0 0.0
  %142 = vmatmul.mubr.f32.gmra.mrb[0].mxu0 %v45
  %v143 = vpop.f32.mrb[0].mxu0
  %v144 = vadd.f32 0.0, %v143
  %v145 = vpop.f32.mrb[0].mxu0
  %v146 = vadd.f32 0.0, %v145
  %147 = vmatprep.mubr.f32.mxu0 0.0
  %148 = vmatmul.mubr.f32.gmra.mrb[0].mxu0 %v48
  %v149 = vpop.f32.mrb[0].mxu0
  %v150 = vadd.f32 0.0, %v149
  %v151 = vpop.f32.mrb[0].mxu0
  %v152 = vadd.f32 0.0, %v151
  %153 = vmatprep.mubr.f32.mxu0 0.0
  %154 = vmatmul.mubr.f32.gmra.mrb[0].mxu0 %v51
  %v155 = vpop.f32.mrb[0].mxu0
  %v156 = vadd.f32 0.0, %v155
  %v157 = vpop.f32.mrb[0].mxu0
  %v158 = vadd.f32 0.0, %v157
  %159 = vmatprep.mubr.f32.mxu0 0.0
  %160 = vmatmul.mubr.f32.gmra.mrb[0].mxu0 %v54
  %v161 = vpop.f32.mrb[0].mxu0
  %v162 = vadd.f32 0.0, %v161
  %v163 = vpop.f32.mrb[0].mxu0
  %v164 = vadd.f32 0.0, %v163
  %165 = vmatprep.mubr.f32.mxu0 0.0
  %166 = vmatmul.mubr.f32.gmra.mrb[0].mxu0 %v57
  %v167 = vpop.f32.mrb[0].mxu0
  %v168 = vadd.f32 0.0, %v167
  %v169 = vpop.f32.mrb[0].mxu0
  %v170 = vadd.f32 0.0, %v169
  %171 = vdwg.mxu0
  %v172 = vmax.f32 %v126, 0.0
  %v173 = vmax.f32 %v128, 0.0
  %v174 = vmax.f32 %v132, 0.0
  %v175 = vmax.f32 %v134, 0.0
  %v176 = vmax.f32 %v138, 0.0
  %v177 = vmax.f32 %v140, 0.0
  %v178 = vmax.f32 %v144, 0.0
  %v179 = vmax.f32 %v146, 0.0
  %v180 = vmax.f32 %v150, 0.0
  %v181 = vmax.f32 %v152, 0.0
  %v182 = vmax.f32 %v156, 0.0
  %v183 = vmax.f32 %v158, 0.0
  %v184 = vmax.f32 %v162, 0.0
  %v185 = vmax.f32 %v164, 0.0
  %v186 = vmax.f32 %v168, 0.0
  %v187 = vmax.f32 %v170, 0.0
  %v188 = vpack.c.bf16 %v174, %v172
  %v189 = vpack.c.bf16 %v175, %v173
  %v190 = vpack.c.bf16 %v178, %v176
  %v191 = vpack.c.bf16 %v179, %v177
  %v192 = vpack.c.bf16 %v182, %v180
  %v193 = vpack.c.bf16 %v183, %v181
  %v194 = vpack.c.bf16 %v186, %v184
  %v195 = vpack.c.bf16 %v187, %v185
  %v196 = vld [vmem:[%s2] sm:$0xf]
  %v197 = vld [vmem:[%s2 + $0x4] sm:$0xf]
  %v198 = vld [vmem:[%s2 + $0x8] sm:$0xf]
  %v199 = vld [vmem:[%s2 + $0xc] sm:$0xf]
  %v200 = vld [vmem:[%s2 + $0x10] sm:$0xf]
  %v201 = vld [vmem:[%s2 + $0x14] sm:$0xf]
  %v202 = vld [vmem:[%s2 + $0x18] sm:$0xf]
  %v203 = vld [vmem:[%s2 + $0x1c] sm:$0xf]
  %v204 = vld [vmem:[%s2 + $0x20] sm:$0xf]
  %v205 = vld [vmem:[%s2 + $0x24] sm:$0xf]
  %v206 = vld [vmem:[%s2 + $0x28] sm:$0xf]
  %v207 = vld [vmem:[%s2 + $0x2c] sm:$0xf]
  %v208 = vld [vmem:[%s2 + $0x30] sm:$0xf]
  %v209 = vld [vmem:[%s2 + $0x34] sm:$0xf]
  %v210 = vld [vmem:[%s2 + $0x38] sm:$0xf]
  %v211 = vld [vmem:[%s2 + $0x3c] sm:$0xf]
  %v212 = vld [vmem:[%s3] sm:$0xff]
  %v213 = vld [vmem:[%s3 + $0x8] sm:$0xff]
  %v214 = vld [vmem:[%s3 + $0x10] sm:$0xff]
  %v215 = vld [vmem:[%s3 + $0x18] sm:$0xff]
  %v216 = vld [vmem:[%s3 + $0x20] sm:$0xff]
  %v217 = vld [vmem:[%s3 + $0x28] sm:$0xff]
  %v218 = vld [vmem:[%s3 + $0x30] sm:$0xff]
  %v219 = vld [vmem:[%s3 + $0x38] sm:$0xff]
  %v220 = vld [vmem:[%s3 + $0x40] sm:$0xff]
  %v221 = vld [vmem:[%s3 + $0x48] sm:$0xff]
  %v222 = vld [vmem:[%s3 + $0x50] sm:$0xff]
  %v223 = vld [vmem:[%s3 + $0x58] sm:$0xff]
  %v224 = vld [vmem:[%s3 + $0x60] sm:$0xff]
  %v225 = vld [vmem:[%s3 + $0x68] sm:$0xff]
  %v226 = vld [vmem:[%s3 + $0x70] sm:$0xff]
  %v227 = vld [vmem:[%s3 + $0x78] sm:$0xff]
  %229 = vset.pattern.permute.xlu0 0
  %230 = vperm.xlu0 %229, %v212
  %v231 = vpop.permute.xlu0 %230
  %234 = vset.pattern.permute.xlu0 0
  %235 = vperm.xlu0 %234, %v213
  %v236 = vpop.permute.xlu0 %235
  %239 = vset.pattern.permute.xlu0 0
  %240 = vperm.xlu0 %239, %v214
  %v241 = vpop.permute.xlu0 %240
  %244 = vset.pattern.permute.xlu0 0
  %245 = vperm.xlu0 %244, %v215
  %v246 = vpop.permute.xlu0 %245
  %249 = vset.pattern.permute.xlu0 0
  %250 = vperm.xlu0 %249, %v216
  %v251 = vpop.permute.xlu0 %250
  %254 = vset.pattern.permute.xlu0 0
  %255 = vperm.xlu0 %254, %v217
  %v256 = vpop.permute.xlu0 %255
  %259 = vset.pattern.permute.xlu0 0
  %260 = vperm.xlu0 %259, %v218
  %v261 = vpop.permute.xlu0 %260
  %264 = vset.pattern.permute.xlu0 0
  %265 = vperm.xlu0 %264, %v219
  %v266 = vpop.permute.xlu0 %265
  %269 = vset.pattern.permute.xlu0 0
  %270 = vperm.xlu0 %269, %v220
  %v271 = vpop.permute.xlu0 %270
  %274 = vset.pattern.permute.xlu0 0
  %275 = vperm.xlu0 %274, %v221
  %v276 = vpop.permute.xlu0 %275
  %279 = vset.pattern.permute.xlu0 0
  %280 = vperm.xlu0 %279, %v222
  %v281 = vpop.permute.xlu0 %280
  %284 = vset.pattern.permute.xlu0 0
  %285 = vperm.xlu0 %284, %v223
  %v286 = vpop.permute.xlu0 %285
  %289 = vset.pattern.permute.xlu0 0
  %290 = vperm.xlu0 %289, %v224
  %v291 = vpop.permute.xlu0 %290
  %294 = vset.pattern.permute.xlu0 0
  %295 = vperm.xlu0 %294, %v225
  %v296 = vpop.permute.xlu0 %295
  %299 = vset.pattern.permute.xlu0 0
  %300 = vperm.xlu0 %299, %v226
  %v301 = vpop.permute.xlu0 %300
  %304 = vset.pattern.permute.xlu0 0
  %305 = vperm.xlu0 %304, %v227
  %v306 = vpop.permute.xlu0 %305
  %v324 = vunpack.c.l.b16 %v196
  %v325 = vunpack.c.l.b16 %v197
  %v326 = vunpack.c.l.b16 %v198
  %v327 = vunpack.c.l.b16 %v199
  %v328 = vunpack.c.l.b16 %v200
  %v329 = vunpack.c.l.b16 %v201
  %v330 = vunpack.c.l.b16 %v202
  %v331 = vunpack.c.l.b16 %v203
  %v332 = vunpack.c.l.b16 %v204
  %v333 = vunpack.c.l.b16 %v205
  %v334 = vunpack.c.l.b16 %v206
  %v335 = vunpack.c.l.b16 %v207
  %v336 = vunpack.c.l.b16 %v208
  %v337 = vunpack.c.l.b16 %v209
  %v338 = vunpack.c.l.b16 %v210
  %v339 = vunpack.c.l.b16 %v211
  %v340 = vpack.c.b16 %v325, %v324
  %v341 = vpack.c.b16 %v327, %v326
  %v342 = vpack.c.b16 %v329, %v328
  %v343 = vpack.c.b16 %v331, %v330
  %v344 = vpack.c.b16 %v333, %v332
  %v345 = vpack.c.b16 %v335, %v334
  %v346 = vpack.c.b16 %v337, %v336
  %v347 = vpack.c.b16 %v339, %v338
  %vm348 = vcmask 523264
  %v350 = vsel %vm348, %v340, 0
  %v353 = vsel %vm348, %v341, 0
  %v356 = vsel %vm348, %v342, 0
  %v359 = vsel %vm348, %v343, 0
  %v362 = vsel %vm348, %v344, 0
  %v365 = vsel %vm348, %v345, 0
  %v368 = vsel %vm348, %v346, 0
  %v371 = vsel %vm348, %v347, 0
  %373 = vmatprep.subr.bf16.mxu0 %v189
  %374 = vmatpush1.bf16.msra.mxu0 %v188
  %375 = vmatprep.subr.bf16.mxu0 %v191
  %376 = vmatpush1.bf16.msra.mxu0 %v190
  %377 = vmatprep.subr.bf16.mxu0 %v193
  %378 = vmatpush1.bf16.msra.mxu0 %v192
  %379 = vmatprep.subr.bf16.mxu0 %v195
  %380 = vmatpush1.bf16.msra.mxu0 %v194
  %381 = vmatprep.subr.bf16.mxu0 0
  %382 = vmatpush1.bf16.msra.mxu0 0
  %383 = vmatprep.subr.bf16.mxu0 0
  %384 = vmatpush1.bf16.msra.mxu0 0
  %385 = vmatprep.subr.bf16.mxu0 0
  %386 = vmatpush1.bf16.msra.mxu0 0
  %387 = vmatprep.subr.bf16.mxu0 0
  %388 = vmatpush1.bf16.msra.mxu0 0
  %389 = vmatprep.subr.bf16.mxu0 0
  %390 = vmatpush1.bf16.msra.mxu0 0
  %391 = vmatprep.subr.bf16.mxu0 0
  %392 = vmatpush1.bf16.msra.mxu0 0
  %393 = vmatprep.subr.bf16.mxu0 0
  %394 = vmatpush1.bf16.msra.mxu0 0
  %395 = vmatprep.subr.bf16.mxu0 0
  %396 = vmatpush1.bf16.msra.mxu0 0
  %397 = vmatprep.subr.bf16.mxu0 0
  %398 = vmatpush1.bf16.msra.mxu0 0
  %399 = vmatprep.subr.bf16.mxu0 0
  %400 = vmatpush1.bf16.msra.mxu0 0
  %401 = vmatprep.subr.bf16.mxu0 0
  %402 = vmatpush1.bf16.msra.mxu0 0
  %403 = vmatprep.subr.bf16.mxu0 0
  %404 = vmatpush1.bf16.msra.mxu0 0
  %405 = vmatprep.mubr.bf16.mxu0 0
  %406 = vmatmul.mubr.bf16.gmra.mrb[0].mxu0 %v350
  %v407 = vpop.f32.mrb[0].mxu0
  %v408 = vadd.f32 %v231, %v407
  %v409 = vpop.f32.mrb[0].mxu0
  %v410 = vadd.f32 %v231, %v409
  %v411 = vpop.f32.mrb[0].mxu0
  %v412 = vadd.f32 %v236, %v411
  %v413 = vpop.f32.mrb[0].mxu0
  %v414 = vadd.f32 %v236, %v413
  %415 = vmatprep.mubr.bf16.mxu0 0
  %416 = vmatmul.mubr.bf16.gmra.mrb[0].mxu0 %v353
  %v417 = vpop.f32.mrb[0].mxu0
  %v418 = vadd.f32 %v241, %v417
  %v419 = vpop.f32.mrb[0].mxu0
  %v420 = vadd.f32 %v241, %v419
  %v421 = vpop.f32.mrb[0].mxu0
  %v422 = vadd.f32 %v246, %v421
  %v423 = vpop.f32.mrb[0].mxu0
  %v424 = vadd.f32 %v246, %v423
  %425 = vmatprep.mubr.bf16.mxu0 0
  %426 = vmatmul.mubr.bf16.gmra.mrb[0].mxu0 %v356
  %v427 = vpop.f32.mrb[0].mxu0
  %v428 = vadd.f32 %v251, %v427
  %v429 = vpop.f32.mrb[0].mxu0
  %v430 = vadd.f32 %v251, %v429
  %v431 = vpop.f32.mrb[0].mxu0
  %v432 = vadd.f32 %v256, %v431
  %v433 = vpop.f32.mrb[0].mxu0
  %v434 = vadd.f32 %v256, %v433
  %435 = vmatprep.mubr.bf16.mxu0 0
  %436 = vmatmul.mubr.bf16.gmra.mrb[0].mxu0 %v359
  %v437 = vpop.f32.mrb[0].mxu0
  %v438 = vadd.f32 %v261, %v437
  %v439 = vpop.f32.mrb[0].mxu0
  %v440 = vadd.f32 %v261, %v439
  %v441 = vpop.f32.mrb[0].mxu0
  %v442 = vadd.f32 %v266, %v441
  %v443 = vpop.f32.mrb[0].mxu0
  %v444 = vadd.f32 %v266, %v443
  %445 = vmatprep.mubr.bf16.mxu0 0
  %446 = vmatmul.mubr.bf16.gmra.mrb[0].mxu0 %v362
  %v447 = vpop.f32.mrb[0].mxu0
  %v448 = vadd.f32 %v271, %v447
  %v449 = vpop.f32.mrb[0].mxu0
  %v450 = vadd.f32 %v271, %v449
  %v451 = vpop.f32.mrb[0].mxu0
  %v452 = vadd.f32 %v276, %v451
  %v453 = vpop.f32.mrb[0].mxu0
  %v454 = vadd.f32 %v276, %v453
  %455 = vmatprep.mubr.bf16.mxu0 0
  %456 = vmatmul.mubr.bf16.gmra.mrb[0].mxu0 %v365
  %v457 = vpop.f32.mrb[0].mxu0
  %v458 = vadd.f32 %v281, %v457
  %v459 = vpop.f32.mrb[0].mxu0
  %v460 = vadd.f32 %v281, %v459
  %v461 = vpop.f32.mrb[0].mxu0
  %v462 = vadd.f32 %v286, %v461
  %v463 = vpop.f32.mrb[0].mxu0
  %v464 = vadd.f32 %v286, %v463
  %465 = vmatprep.mubr.bf16.mxu0 0
  %466 = vmatmul.mubr.bf16.gmra.mrb[0].mxu0 %v368
  %v467 = vpop.f32.mrb[0].mxu0
  %v468 = vadd.f32 %v291, %v467
  %v469 = vpop.f32.mrb[0].mxu0
  %v470 = vadd.f32 %v291, %v469
  %v471 = vpop.f32.mrb[0].mxu0
  %v472 = vadd.f32 %v296, %v471
  %v473 = vpop.f32.mrb[0].mxu0
  %v474 = vadd.f32 %v296, %v473
  %475 = vmatprep.mubr.bf16.mxu0 0
  %476 = vmatmul.mubr.bf16.gmra.mrb[0].mxu0 %v371
  %v477 = vpop.f32.mrb[0].mxu0
  %v478 = vadd.f32 %v301, %v477
  %v479 = vpop.f32.mrb[0].mxu0
  %v480 = vadd.f32 %v301, %v479
  %v481 = vpop.f32.mrb[0].mxu0
  %v482 = vadd.f32 %v306, %v481
  %v483 = vpop.f32.mrb[0].mxu0
  %v484 = vadd.f32 %v306, %v483
  %485 = vdwg.mxu0
  %v486 = vmax.f32 %v408, 0.0
  %v487 = vmax.f32 %v410, 0.0
  %v488 = vmax.f32 %v412, 0.0
  %v489 = vmax.f32 %v414, 0.0
  %v490 = vmax.f32 %v418, 0.0
  %v491 = vmax.f32 %v420, 0.0
  %v492 = vmax.f32 %v422, 0.0
  %v493 = vmax.f32 %v424, 0.0
  %v494 = vmax.f32 %v428, 0.0
  %v495 = vmax.f32 %v430, 0.0
  %v496 = vmax.f32 %v432, 0.0
  %v497 = vmax.f32 %v434, 0.0
  %v498 = vmax.f32 %v438, 0.0
  %v499 = vmax.f32 %v440, 0.0
  %v500 = vmax.f32 %v442, 0.0
  %v501 = vmax.f32 %v444, 0.0
  %v502 = vmax.f32 %v448, 0.0
  %v503 = vmax.f32 %v450, 0.0
  %v504 = vmax.f32 %v452, 0.0
  %v505 = vmax.f32 %v454, 0.0
  %v506 = vmax.f32 %v458, 0.0
  %v507 = vmax.f32 %v460, 0.0
  %v508 = vmax.f32 %v462, 0.0
  %v509 = vmax.f32 %v464, 0.0
  %v510 = vmax.f32 %v468, 0.0
  %v511 = vmax.f32 %v470, 0.0
  %v512 = vmax.f32 %v472, 0.0
  %v513 = vmax.f32 %v474, 0.0
  %v514 = vmax.f32 %v478, 0.0
  %v515 = vmax.f32 %v480, 0.0
  %v516 = vmax.f32 %v482, 0.0
  %v517 = vmax.f32 %v484, 0.0
  %v518 = vpack.c.bf16 %v488, %v486
  %v519 = vpack.c.bf16 %v489, %v487
  %v520 = vpack.c.bf16 %v492, %v490
  %v521 = vpack.c.bf16 %v493, %v491
  %v522 = vpack.c.bf16 %v496, %v494
  %v523 = vpack.c.bf16 %v497, %v495
  %v524 = vpack.c.bf16 %v500, %v498
  %v525 = vpack.c.bf16 %v501, %v499
  %v526 = vpack.c.bf16 %v504, %v502
  %v527 = vpack.c.bf16 %v505, %v503
  %v528 = vpack.c.bf16 %v508, %v506
  %v529 = vpack.c.bf16 %v509, %v507
  %v530 = vpack.c.bf16 %v512, %v510
  %v531 = vpack.c.bf16 %v513, %v511
  %v532 = vpack.c.bf16 %v516, %v514
  %v533 = vpack.c.bf16 %v517, %v515
  %v534 = vld [vmem:[%s4] sm:$0x3]
  %v535 = vld [vmem:[%s5] sm:$0x7]
  %537 = vset.pattern.permute.xlu0 0
  %538 = vperm.xlu0 %537, %v535
  %v539 = vpop.permute.xlu0 %538
  %541 = vmatprep.subr.bf16.mxu0 %v519
  %542 = vmatpush1.bf16.msra.mxu0 %v518
  %543 = vmatprep.subr.bf16.mxu0 %v521
  %544 = vmatpush1.bf16.msra.mxu0 %v520
  %545 = vmatprep.subr.bf16.mxu0 %v523
  %546 = vmatpush1.bf16.msra.mxu0 %v522
  %547 = vmatprep.subr.bf16.mxu0 %v525
  %548 = vmatpush1.bf16.msra.mxu0 %v524
  %549 = vmatprep.subr.bf16.mxu0 %v527
  %550 = vmatpush1.bf16.msra.mxu0 %v526
  %551 = vmatprep.subr.bf16.mxu0 %v529
  %552 = vmatpush1.bf16.msra.mxu0 %v528
  %553 = vmatprep.subr.bf16.mxu0 %v531
  %554 = vmatpush1.bf16.msra.mxu0 %v530
  %555 = vmatprep.subr.bf16.mxu0 %v533
  %556 = vmatpush1.bf16.msra.mxu0 %v532
  %557 = vmatprep.subr.bf16.mxu0 0
  %558 = vmatpush1.bf16.msra.mxu0 0
  %559 = vmatprep.subr.bf16.mxu0 0
  %560 = vmatpush1.bf16.msra.mxu0 0
  %561 = vmatprep.subr.bf16.mxu0 0
  %562 = vmatpush1.bf16.msra.mxu0 0
  %563 = vmatprep.subr.bf16.mxu0 0
  %564 = vmatpush1.bf16.msra.mxu0 0
  %565 = vmatprep.subr.bf16.mxu0 0
  %566 = vmatpush1.bf16.msra.mxu0 0
  %567 = vmatprep.subr.bf16.mxu0 0
  %568 = vmatpush1.bf16.msra.mxu0 0
  %569 = vmatprep.subr.bf16.mxu0 0
  %570 = vmatpush1.bf16.msra.mxu0 0
  %571 = vmatprep.subr.bf16.mxu0 0
  %572 = vmatpush1.bf16.msra.mxu0 0
  %573 = vmatprep.mubr.bf16.mxu0 0
  %574 = vmatmul.mubr.bf16.gmra.mrb[0].mxu0 %v534
  %v575 = vpop.f32.mrb[0].mxu0
  %v576 = vadd.f32 %v539, %v575
  %v577 = vpop.f32.mrb[0].mxu0
  %v578 = vadd.f32 %v539, %v577
  %v579 = vpop.f32.mrb[0].mxu0
  %v580 = vpop.f32.mrb[0].mxu0
  %581 = vdwg.mxu0
  %v584 = vcombine.low %v576, %v578
  %586 = vst [vmem:[%s6] sm:$0x77] %v584
  // Predicated region
  $region26: #{pointnet_forward.1} parent=0 // pred_check
    _
  $region27: #{pointnet_forward.1} parent=0 // pred_check_branch
    %588 = sbr.rel (0) target = $region29
  $region28: #{pointnet_forward.1} parent=0 // pred_region
    _
  $region29: #{pointnet_forward.1} parent=0 // pred_fallthru
    _
  // Predicated region
  $region30: #{pointnet_forward.1} parent=0 // pred_check
    _
  $region31: #{pointnet_forward.1} parent=0 // pred_check_branch
    %590 = sbr.rel (0) target = $region33
  $region32: #{pointnet_forward.1} parent=0 // pred_region
    _
  $region33: #{pointnet_forward.1} parent=0 // pred_fallthru
    _

</llo_original>
